<compile_context>
chip_gen: v6e
topology: v6e:2x2x1
jax: 0.10.0
libtpu: 0.0.40
codegen_flags: <defaults>
</compile_context>

<pallas_src>
import functools

import numpy as np
import jax
import jax.numpy as jnp
from jax import lax
from jax.experimental import pallas as pl
from jax.experimental.pallas import tpu as pltpu

MARGIN = 0.5
GATE_SCALE = 5.0
EPS = 1e-8            # matches torch.nn.functional.cosine_similarity eps
EPS_SQ = EPS * EPS
BIG = 1e30


def _round_up(x, m):
    return ((x + m - 1) // m) * m


# -----------------------------------------------------------------------------
# Pass 1 kernel: combined (gated) difference per batch row.
# -----------------------------------------------------------------------------
def _diff_kernel(gate_ref, tok1_ref, tok2_ref, sent1_ref, sent2_ref,
                 diff_ref, acc_ref, *, inv_num_tokens):
    t_idx = pl.program_id(1)

    @pl.when(t_idx == 0)
    def _init():
        acc_ref[...] = jnp.zeros_like(acc_ref)

    # Cast per-tile (inputs may be bf16 to halve HBM traffic; accumulate in f32).
    tok1 = tok1_ref[...].astype(jnp.float32)            # (Bb, Tb, D)
    tok2 = tok2_ref[...].astype(jnp.float32)

    dot_t = jnp.sum(tok1 * tok2, axis=-1)               # (Bb, Tb)
    sq1 = jnp.sum(tok1 * tok1, axis=-1)
    sq2 = jnp.sum(tok2 * tok2, axis=-1)
    # cos = dot / (max(|a|,eps) * max(|b|,eps)); rsqrt goes to the EUP slot.
    cos_t = (dot_t
             * lax.rsqrt(jnp.maximum(sq1, EPS_SQ))
             * lax.rsqrt(jnp.maximum(sq2, EPS_SQ)))
    acc_ref[...] += jnp.sum(cos_t, axis=1, keepdims=True)   # (Bb, 1)

    @pl.when(t_idx == pl.num_programs(1) - 1)
    def _finalize():
        s1 = sent1_ref[...].astype(jnp.float32)          # (Bb, D)
        s2 = sent2_ref[...].astype(jnp.float32)
        dot_s = jnp.sum(s1 * s2, axis=-1, keepdims=True)
        n1 = jnp.maximum(jnp.sum(s1 * s1, axis=-1, keepdims=True), EPS_SQ)
        n2 = jnp.maximum(jnp.sum(s2 * s2, axis=-1, keepdims=True), EPS_SQ)
        global_diff = 1.0 - dot_s * lax.rsqrt(n1) * lax.rsqrt(n2)    # (Bb, 1)
        local_diff = 1.0 - acc_ref[...] * inv_num_tokens             # (Bb, 1)

        gate_value = gate_ref[0]      # sigmoid(gate_scale * gate), from SMEM
        diff = gate_value * local_diff + (1.0 - gate_value) * global_diff
        # Lane-dense (unmasked) store: broadcast the per-row diff across lanes.
        diff_ref[...] = jnp.broadcast_to(diff, diff_ref.shape)


# -----------------------------------------------------------------------------
# Pass 2 kernel: online hard mining + final scalar loss (O(B), single block).
# -----------------------------------------------------------------------------
def _mine_kernel(diff_ref, labels_ref, out_ref):
    diff = diff_ref[...]              # (1, B_lane) f32
    labels = labels_ref[...]          # (1, B_lane) f32; padding rows = -1

    pos_w = jnp.where(labels == 1.0, 1.0, 0.0)
    neg_w = jnp.where(labels == 0.0, 1.0, 0.0)

    has_pos = jnp.sum(pos_w) > 0.0
    has_neg = jnp.sum(neg_w) > 0.0
    both = jnp.logical_and(has_pos, has_neg).astype(jnp.float32)

    neg_min = jnp.min(jnp.where(neg_w > 0.0, diff, BIG))     # scalar
    pos_max = jnp.max(jnp.where(pos_w > 0.0, diff, -BIG))    # scalar

    hp_w = pos_w * jnp.where(diff > neg_min, 1.0, 0.0)       # hard positives
    hn_w = neg_w * jnp.where(diff < pos_max, 1.0, 0.0)       # hard negatives

    use_hp = both * jnp.where(jnp.sum(hp_w) > 0.0, 1.0, 0.0)
    use_hn = both * jnp.where(jnp.sum(hn_w) > 0.0, 1.0, 0.0)

    hard_pos_w = use_hp * hp_w + (1.0 - use_hp) * pos_w
    hard_neg_w = use_hn * hn_w + (1.0 - use_hn) * neg_w

    positive_loss = jnp.sum(hard_pos_w * diff * diff)
    hinge = jnp.maximum(MARGIN - diff, 0.0)
    negative_loss = jnp.sum(hard_neg_w * hinge * hinge)

    out_ref[...] = (positive_loss + negative_loss).reshape(1, 1)


# -----------------------------------------------------------------------------
# Tiling / wrapper
# -----------------------------------------------------------------------------
def _choose_tiles(B, T, D, itemsize):
    """Pick (b_blk, t_blk) so 2 token inputs x 2 pipeline buffers fit a budget
    that is safe on v7x (64 MiB physical VMEM) as well as v5e/v6e (128 MiB)."""
    token_budget = 16 * 1024 * 1024
    b_pad8 = _round_up(B, 8)
    b_blk = min(32, b_pad8)
    for cand in range(b_blk - (b_blk % 8), 7, -8):   # prefer tiles dividing B
        if b_pad8 % cand == 0:
            b_blk = cand
            break

    rows = max(token_budget // (4 * D * itemsize), 8)    # rows = b_blk * t_blk
    t_pad8 = _round_up(T, 8)
    t_blk = max(min(rows // b_blk, t_pad8), 8)
    for cand in range(t_blk - (t_blk % 8), 7, -8):   # prefer tiles dividing T
        if t_pad8 % cand == 0:
            t_blk = cand
            break
    return b_blk, t_blk


def context_adaptive_contrastive_loss(gate, tok1, tok2, sent1, sent2, labels):
    """gate: scalar parameter; tok*: [B,T,D]; sent*: [B,D]; labels: [B] int."""
    B, T, D = tok1.shape
    itemsize = jnp.dtype(tok1.dtype).itemsize
    b_blk, t_blk = _choose_tiles(B, T, D, itemsize)
    B_pad = _round_up(B, b_blk)
    T_pad = _round_up(T, t_blk)

    if (B_pad, T_pad) != (B, T):
        tok1 = jnp.pad(tok1, ((0, B_pad - B), (0, T_pad - T), (0, 0)))
        tok2 = jnp.pad(tok2, ((0, B_pad - B), (0, T_pad - T), (0, 0)))
    if B_pad != B:
        sent1 = jnp.pad(sent1, ((0, B_pad - B), (0, 0)))
        sent2 = jnp.pad(sent2, ((0, B_pad - B), (0, 0)))

    # Gate sigmoid computed once on the scalar path, passed through SMEM.
    gate_value = jax.nn.sigmoid(
        jnp.asarray(gate, jnp.float32) * GATE_SCALE).reshape(1)

    grid = (B_pad // b_blk, T_pad // t_blk)
    tok_spec = pl.BlockSpec((b_blk, t_blk, D), lambda b, t: (b, t, 0))
    sent_spec = pl.BlockSpec((b_blk, D), lambda b, t: (b, 0))
    out_spec = pl.BlockSpec((b_blk, 128), lambda b, t: (b, 0))

    tok_block_bytes = b_blk * t_blk * D * itemsize
    sent_block_bytes = b_blk * D * itemsize
    vmem_limit = int(min(max(6 * tok_block_bytes + 4 * sent_block_bytes
                             + 2 * b_blk * 128 * 4 + (4 << 20), 32 << 20),
                         64 << 20))

    cost = pl.CostEstimate(
        flops=int(8 * B_pad * T_pad * D + 10 * B_pad * D),
        transcendentals=int(2 * B_pad * T_pad + 2 * B_pad),
        bytes_accessed=int((2 * B_pad * T_pad * D + 2 * B_pad * D) * itemsize
                           + B_pad * 128 * 4),
    )

    diff_wide = pl.pallas_call(
        functools.partial(_diff_kernel, inv_num_tokens=1.0 / T),
        out_shape=jax.ShapeDtypeStruct((B_pad, 128), jnp.float32),
        grid_spec=pltpu.PrefetchScalarGridSpec(
            num_scalar_prefetch=0,
            grid=grid,
            in_specs=[
                pl.BlockSpec(memory_space=pltpu.MemorySpace.SMEM),  # gate
                tok_spec,    # tok1
                tok_spec,    # tok2
                sent_spec,   # sent1
                sent_spec,   # sent2
            ],
            out_specs=out_spec,
            scratch_shapes=[pltpu.VMEM((b_blk, 1), jnp.float32)],
        ),
        compiler_params=pltpu.CompilerParams(
            dimension_semantics=("parallel", "arbitrary"),
            vmem_limit_bytes=vmem_limit),
        cost_estimate=cost,
    )(gate_value, tok1, tok2, sent1, sent2)

    diff = diff_wide[:B, 0]                                  # (B,)

    # ---- pass 2: lane-dense mining + final reduction ----
    B_lane = _round_up(B, 128)
    diff_l = jnp.pad(diff, (0, B_lane - B)).reshape(1, B_lane)
    labels_l = jnp.pad(labels.astype(jnp.float32), (0, B_lane - B),
                       constant_values=-1.0).reshape(1, B_lane)

    vmem = pltpu.MemorySpace.VMEM
    total = pl.pallas_call(
        _mine_kernel,
        out_shape=jax.ShapeDtypeStruct((1, 1), jnp.float32),
        in_specs=[pl.BlockSpec(memory_space=vmem),
                  pl.BlockSpec(memory_space=vmem)],
        out_specs=pl.BlockSpec(memory_space=vmem),
    )(diff_l, labels_l)
    return total[0, 0]


# ------------------------- pure numpy reference ------------------------------
def _reference_loss(gate, tok1, tok2, sent1, sent2, labels):
    tok1, tok2 = np.asarray(tok1, np.float32), np.asarray(tok2, np.float32)
    sent1, sent2 = np.asarray(sent1, np.float32), np.asarray(sent2, np.float32)
    labels = np.asarray(labels)

    def cos(a, b):
        na = np.maximum(np.linalg.norm(a, axis=-1), EPS)
        nb = np.maximum(np.linalg.norm(b, axis=-1), EPS)
        return np.sum(a * b, axis=-1) / (na * nb)

    local_diff = 1.0 - cos(tok1, tok2).mean(axis=1)
    global_diff = 1.0 - cos(sent1, sent2)
    gv = 1.0 / (1.0 + np.exp(-GATE_SCALE * gate))
    diff = gv * local_diff + (1.0 - gv) * global_diff

    pos = diff[labels == 1]
    neg = diff[labels == 0]
    if len(pos) > 0 and len(neg) > 0:
        hp = pos[pos > neg.min()]
        hn = neg[neg < pos.max()]
        if len(hp) == 0:
            hp = pos
        if len(hn) == 0:
            hn = neg
    else:
        hp, hn = pos, neg
    pos_loss = np.sum(hp ** 2) if len(hp) > 0 else 0.0
    neg_loss = np.sum(np.maximum(MARGIN - hn, 0.0) ** 2) if len(hn) > 0 else 0.0
    return np.float32(pos_loss + neg_loss)


if __name__ == "__main__":
    B, T, D = 8, 16, 128
    key = jax.random.PRNGKey(0)
    k1, k2, k3, k4 = jax.random.split(key, 4)

    tok1 = jax.random.normal(k1, (B, T, D), dtype=jnp.float32)
    tok2 = jax.random.normal(k2, (B, T, D), dtype=jnp.float32)
    sent1 = jax.random.normal(k3, (B, D), dtype=jnp.float32)
    sent2 = jax.random.normal(k4, (B, D), dtype=jnp.float32)
    labels = jnp.array([1, 0, 1, 0, 1, 1, 0, 0], dtype=jnp.int32)
    gate = 0.0  # deterministic init: nn.Parameter(torch.tensor(0.0))

    # f32 path
    loss = context_adaptive_contrastive_loss(gate, tok1, tok2, sent1, sent2, labels)
    loss = jax.block_until_ready(loss)
    ref = _reference_loss(gate, tok1, tok2, sent1, sent2, labels)
    np.testing.assert_allclose(np.asarray(loss), ref, rtol=1e-4, atol=1e-4)

    # bf16 path (halves HBM traffic; kernel accumulates in f32)
    tok1_bf, tok2_bf = tok1.astype(jnp.bfloat16), tok2.astype(jnp.bfloat16)
    sent1_bf, sent2_bf = sent1.astype(jnp.bfloat16), sent2.astype(jnp.bfloat16)
    loss_bf = context_adaptive_contrastive_loss(
        gate, tok1_bf, tok2_bf, sent1_bf, sent2_bf, labels)
    loss_bf = jax.block_until_ready(loss_bf)
    ref_bf = _reference_loss(
        gate,
        tok1_bf.astype(jnp.float32), tok2_bf.astype(jnp.float32),
        sent1_bf.astype(jnp.float32), sent2_bf.astype(jnp.float32), labels)
    np.testing.assert_allclose(np.asarray(loss_bf), ref_bf, rtol=1e-3, atol=1e-3)

    print("KERNEL_OK")
</pallas_src>

<mosaic_0001>
module attributes {stable_mosaic.version = 11 : i64} {
  func.func @_diff_kernel(%arg0: i32, %arg1: i32, %arg2: memref<1xf32, #tpu.memory_space<smem>>, %arg3: memref<8x16x128xf32, #tpu.memory_space<vmem>>, %arg4: memref<8x16x128xf32, #tpu.memory_space<vmem>>, %arg5: memref<8x128xf32, #tpu.memory_space<vmem>>, %arg6: memref<8x128xf32, #tpu.memory_space<vmem>>, %arg7: memref<8x128xf32, #tpu.memory_space<vmem>>, %arg8: memref<8x1xf32, #tpu.memory_space<vmem>>) attributes {dimension_semantics = [#tpu.dimension_semantics<parallel>, #tpu.dimension_semantics<arbitrary>], iteration_bounds = array<i64: 1, 1>, scalar_prefetch = 0 : i64, scratch_operands = 1 : i64, tpu.core_type = #tpu.core_type<tc>, window_params = [{transform_indices = @transform_0, window_bounds = array<i64: 1>}, {transform_indices = @transform_1, window_bounds = array<i64: 8, 16, 128>}, {transform_indices = @transform_2, window_bounds = array<i64: 8, 16, 128>}, {transform_indices = @transform_3, window_bounds = array<i64: 8, 128>}, {transform_indices = @transform_4, window_bounds = array<i64: 8, 128>}, {transform_indices = @transform_5, window_bounds = array<i64: 8, 128>}]} {
    %c0_i32 = arith.constant 0 : i32
    %0 = arith.cmpi eq, %arg1, %c0_i32 : i32
    %1 = arith.extui %0 : i1 to i32
    %c0_i32_0 = arith.constant 0 : i32
    %2 = arith.cmpi ne, %1, %c0_i32_0 : i32
    scf.if %2 {
      %cst_17 = arith.constant 0.000000e+00 : f32
      %27 = vector.broadcast %cst_17 : f32 to vector<8x1xf32>
      %c0_18 = arith.constant 0 : index
      %c0_19 = arith.constant 0 : index
      %28 = vector.load %arg8[%c0_18, %c0_19] : memref<8x1xf32, #tpu.memory_space<vmem>>, vector<8x1xf32>
      tpu.vector_store %arg8[%c0_18, %c0_19], %27 {strides = array<i32>} : memref<8x1xf32, #tpu.memory_space<vmem>>, vector<8x1xf32>,
    } else {
    }
    %c0 = arith.constant 0 : index
    %c0_1 = arith.constant 0 : index
    %c0_2 = arith.constant 0 : index
    %3 = vector.load %arg3[%c0, %c0_1, %c0_2] : memref<8x16x128xf32, #tpu.memory_space<vmem>>, vector<8x16x128xf32>
    %c0_3 = arith.constant 0 : index
    %c0_4 = arith.constant 0 : index
    %c0_5 = arith.constant 0 : index
    %4 = vector.load %arg4[%c0_3, %c0_4, %c0_5] : memref<8x16x128xf32, #tpu.memory_space<vmem>>, vector<8x16x128xf32>
    %5 = arith.mulf %3, %4 : vector<8x16x128xf32>
    %cst = arith.constant dense<0.000000e+00> : vector<8x16xf32>
    %6 = vector.multi_reduction <add>, %5, %cst [2] : vector<8x16x128xf32> to vector<8x16xf32>
    %7 = arith.mulf %3, %3 : vector<8x16x128xf32>
    %cst_6 = arith.constant dense<0.000000e+00> : vector<8x16xf32>
    %8 = vector.multi_reduction <add>, %7, %cst_6 [2] : vector<8x16x128xf32> to vector<8x16xf32>
    %9 = arith.mulf %4, %4 : vector<8x16x128xf32>
    %cst_7 = arith.constant dense<0.000000e+00> : vector<8x16xf32>
    %10 = vector.multi_reduction <add>, %9, %cst_7 [2] : vector<8x16x128xf32> to vector<8x16xf32>
    %cst_8 = arith.constant 1.000000e-16 : f32
    %11 = vector.broadcast %cst_8 : f32 to vector<8x16xf32>
    %12 = arith.maximumf %8, %11 : vector<8x16xf32>
    %13 = math.rsqrt %12 : vector<8x16xf32>
    %14 = arith.mulf %6, %13 : vector<8x16xf32>
    %cst_9 = arith.constant 1.000000e-16 : f32
    %15 = vector.broadcast %cst_9 : f32 to vector<8x16xf32>
    %16 = arith.maximumf %10, %15 : vector<8x16xf32>
    %17 = math.rsqrt %16 : vector<8x16xf32>
    %18 = arith.mulf %14, %17 : vector<8x16xf32>
    %c0_10 = arith.constant 0 : index
    %c0_11 = arith.constant 0 : index
    %19 = vector.load %arg8[%c0_10, %c0_11] : memref<8x1xf32, #tpu.memory_space<vmem>>, vector<8x1xf32>
    %cst_12 = arith.constant dense<0.000000e+00> : vector<8xf32>
    %20 = vector.multi_reduction <add>, %18, %cst_12 [1] : vector<8x16xf32> to vector<8xf32>
    %21 = vector.shape_cast %20 : vector<8xf32> to vector<8x1xf32>
    %22 = arith.addf %19, %21 : vector<8x1xf32>
    %c0_13 = arith.constant 0 : index
    %c0_14 = arith.constant 0 : index
    %23 = vector.load %arg8[%c0_13, %c0_14] : memref<8x1xf32, #tpu.memory_space<vmem>>, vector<8x1xf32>
    tpu.vector_store %arg8[%c0_13, %c0_14], %22 {strides = array<i32>} : memref<8x1xf32, #tpu.memory_space<vmem>>, vector<8x1xf32>,
    %c0_i32_15 = arith.constant 0 : i32
    %24 = arith.cmpi eq, %arg1, %c0_i32_15 : i32
    %25 = arith.extui %24 : i1 to i32
    %c0_i32_16 = arith.constant 0 : i32
    %26 = arith.cmpi ne, %25, %c0_i32_16 : i32
    scf.if %26 {
      %c0_17 = arith.constant 0 : index
      %c0_18 = arith.constant 0 : index
      %27 = vector.load %arg5[%c0_17, %c0_18] : memref<8x128xf32, #tpu.memory_space<vmem>>, vector<8x128xf32>
      %c0_19 = arith.constant 0 : index
      %c0_20 = arith.constant 0 : index
      %28 = vector.load %arg6[%c0_19, %c0_20] : memref<8x128xf32, #tpu.memory_space<vmem>>, vector<8x128xf32>
      %29 = arith.mulf %27, %28 : vector<8x128xf32>
      %cst_21 = arith.constant dense<0.000000e+00> : vector<8xf32>
      %30 = vector.multi_reduction <add>, %29, %cst_21 [1] : vector<8x128xf32> to vector<8xf32>
      %31 = vector.shape_cast %30 : vector<8xf32> to vector<8x1xf32>
      %32 = arith.mulf %27, %27 : vector<8x128xf32>
      %cst_22 = arith.constant dense<0.000000e+00> : vector<8xf32>
      %33 = vector.multi_reduction <add>, %32, %cst_22 [1] : vector<8x128xf32> to vector<8xf32>
      %34 = vector.shape_cast %33 : vector<8xf32> to vector<8x1xf32>
      %cst_23 = arith.constant 1.000000e-16 : f32
      %35 = vector.broadcast %cst_23 : f32 to vector<8x1xf32>
      %36 = arith.maximumf %34, %35 : vector<8x1xf32>
      %37 = arith.mulf %28, %28 : vector<8x128xf32>
      %cst_24 = arith.constant dense<0.000000e+00> : vector<8xf32>
      %38 = vector.multi_reduction <add>, %37, %cst_24 [1] : vector<8x128xf32> to vector<8xf32>
      %39 = vector.shape_cast %38 : vector<8xf32> to vector<8x1xf32>
      %cst_25 = arith.constant 1.000000e-16 : f32
      %40 = vector.broadcast %cst_25 : f32 to vector<8x1xf32>
      %41 = arith.maximumf %39, %40 : vector<8x1xf32>
      %42 = math.rsqrt %36 : vector<8x1xf32>
      %43 = arith.mulf %31, %42 : vector<8x1xf32>
      %44 = math.rsqrt %41 : vector<8x1xf32>
      %45 = arith.mulf %43, %44 : vector<8x1xf32>
      %cst_26 = arith.constant 1.000000e+00 : f32
      %46 = vector.broadcast %cst_26 : f32 to vector<8x1xf32>
      %47 = arith.subf %46, %45 : vector<8x1xf32>
      %c0_27 = arith.constant 0 : index
      %c0_28 = arith.constant 0 : index
      %48 = vector.load %arg8[%c0_27, %c0_28] : memref<8x1xf32, #tpu.memory_space<vmem>>, vector<8x1xf32>
      %cst_29 = arith.constant 6.250000e-02 : f32
      %49 = vector.broadcast %cst_29 : f32 to vector<8x1xf32>
      %50 = arith.mulf %48, %49 : vector<8x1xf32>
      %cst_30 = arith.constant 1.000000e+00 : f32
      %51 = vector.broadcast %cst_30 : f32 to vector<8x1xf32>
      %52 = arith.subf %51, %50 : vector<8x1xf32>
      %c0_31 = arith.constant 0 : index
      %53 = memref.load %arg2[%c0_31] : memref<1xf32, #tpu.memory_space<smem>>
      %54 = vector.broadcast %53 : f32 to vector<8x1xf32>
      %55 = arith.mulf %54, %52 : vector<8x1xf32>
      %cst_32 = arith.constant 1.000000e+00 : f32
      %56 = arith.subf %cst_32, %53 : f32
      %57 = vector.broadcast %56 : f32 to vector<8x1xf32>
      %58 = arith.mulf %57, %47 : vector<8x1xf32>
      %59 = arith.addf %55, %58 : vector<8x1xf32>
      %60 = vector.shape_cast %59 : vector<8x1xf32> to vector<8x1xf32>
      %61 = vector.broadcast %60 : vector<8x1xf32> to vector<8x128xf32>
      %c0_33 = arith.constant 0 : index
      %c0_34 = arith.constant 0 : index
      %62 = vector.load %arg7[%c0_33, %c0_34] : memref<8x128xf32, #tpu.memory_space<vmem>>, vector<8x128xf32>
      tpu.vector_store %arg7[%c0_33, %c0_34], %61 {strides = array<i32>} : memref<8x128xf32, #tpu.memory_space<vmem>>, vector<8x128xf32>,
    } else {
    }
    return
  }
  func.func @transform_0(%arg0: i32, %arg1: i32) -> i32 {
    %c0_i32 = arith.constant 0 : i32
    %c0_i32_0 = arith.constant 0 : i32
    return %c0_i32 : i32
  }
  func.func @transform_1(%arg0: i32, %arg1: i32) -> (i32, i32, i32) {
    %c0_i32 = arith.constant 0 : i32
    %c0_i32_0 = arith.constant 0 : i32
    return %arg0, %arg1, %c0_i32 : i32, i32, i32
  }
  func.func @transform_2(%arg0: i32, %arg1: i32) -> (i32, i32, i32) {
    %c0_i32 = arith.constant 0 : i32
    %c0_i32_0 = arith.constant 0 : i32
    return %arg0, %arg1, %c0_i32 : i32, i32, i32
  }
  func.func @transform_3(%arg0: i32, %arg1: i32) -> (i32, i32) {
    %c0_i32 = arith.constant 0 : i32
    %c0_i32_0 = arith.constant 0 : i32
    return %arg0, %c0_i32 : i32, i32
  }
  func.func @transform_4(%arg0: i32, %arg1: i32) -> (i32, i32) {
    %c0_i32 = arith.constant 0 : i32
    %c0_i32_0 = arith.constant 0 : i32
    return %arg0, %c0_i32 : i32, i32
  }
  func.func @transform_5(%arg0: i32, %arg1: i32) -> (i32, i32) {
    %c0_i32 = arith.constant 0 : i32
    %c0_i32_0 = arith.constant 0 : i32
    return %arg0, %c0_i32 : i32, i32
  }
}

</mosaic_0001>

<llo_original>
// kernel: tpu_custom_call.1
$region0: #{tpu_custom_call.1}
  #allocation0 [shape = 'u32[]', space=smem, size = 0x4, offset = 0x4, fixed_abs, tag = 'smem constant byte address 0x4 - core index']
  #allocation1 [shape = 'u32[144,128]{1,0:T(1,128)}', space=vmem, size = 0x12000, scoped, tag = 'internal scratch']
  #allocation2 [shape = 'f32[8,1]{1,0:T(8,128)}', space=vmem, size = 0x1000, scoped, tag = 'scratch operand']
  #allocation3 [shape = 'f32[1]{0:T(128)S(6)}', space=smem, size = 0x200, scoped, tag = 'scoped memory for tpu_custom_call.1']
  %s0 = inlined_call_operand.<no memory space> [shape: f32[1], index: 0, kind: input, shape index: {}]
  %s1 = inlined_call_operand.hbm [shape: f32[8,16,128], index: 1, kind: input, shape index: {}]
  %s2 = inlined_call_operand.hbm [shape: f32[8,16,128], index: 2, kind: input, shape index: {}]
  %s3 = inlined_call_operand.hbm [shape: f32[8,128], index: 3, kind: input, shape index: {}]
  %s4 = inlined_call_operand.hbm [shape: f32[8,128], index: 4, kind: input, shape index: {}]
  %s5 = inlined_call_operand.hbm [shape: f32[8,128], index: 5, kind: output, shape index: {}]
  %s6 = sld [smem:[#allocation0]]
  $region54: #{tpu_custom_call.1} parent=0
    _
  %s8 = ssub.s32 1, %s6
  %s9 = scalar_select 0, %s8, %s6
  %10 = sst [smem:[#allocation3]] %s0
  $region1: #{tpu_custom_call.1} parent=0
    #allocation4 [shape = 'u8[65536]{0}', space=vmem, size = 0x10000, scoped, tag = 'input window, operand 1, single buffered']
    #allocation5 [shape = 's32[1]{0}', space=sflag, size = 0x4, scoped, tag = 'scoped memory for tpu_custom_call.1']
    #allocation6 [shape = 's32[1]{0}', space=sflag, size = 0x4, scoped, tag = 'scoped memory for tpu_custom_call.1']
    #allocation7 [shape = 'u8[65536]{0}', space=vmem, size = 0x10000, scoped, tag = 'input window, operand 2, single buffered']
    #allocation8 [shape = 's32[1]{0}', space=sflag, size = 0x4, scoped, tag = 'scoped memory for tpu_custom_call.1']
    #allocation9 [shape = 'u8[4096]{0}', space=vmem, size = 0x1000, scoped, tag = 'input window, operand 3, single buffered']
    #allocation10 [shape = 'u8[4096]{0}', space=vmem, size = 0x1000, scoped, tag = 'input window, operand 4, single buffered']
    #allocation11 [shape = 's32[1]{0}', space=sflag, size = 0x4, scoped, tag = 'scoped memory for tpu_custom_call.1']
    #allocation12 [shape = 'u8[4096]{0}', space=vmem, size = 0x1000, scoped, tag = 'output window, operand 0, single buffered']
    %11 = vsyncpa [#allocation5], 0
    %12 = vsyncpa [#allocation8], 0
    %13 = vsyncpa [#allocation11], 0
    %14 = vsyncpa [#allocation6], 0
    // Predicated region
    $region2: #{tpu_custom_call.1} parent=1 // pred_check
      _
    $region3: #{tpu_custom_call.1} parent=1 // pred_check_branch
      %16 = sbr.rel (0) target = $region5
    $region4: #{tpu_custom_call.1} parent=1 // pred_region
      _
    $region5: #{tpu_custom_call.1} parent=1 // pred_fallthru
      _
    // Predicated region
    $region6: #{tpu_custom_call.1} parent=1 // pred_check
      _
    $region7: #{tpu_custom_call.1} parent=1 // pred_check_branch
      %18 = sbr.rel (0) target = $region9
    $region8: #{tpu_custom_call.1} parent=1 // pred_region
      %s20 = ssub.s32 2048, 2048
      %21 = vsyncadd [#allocation5], %s20
      %s22 = sshll.u32 [#allocation4], 4
      %s23 = int_to_ptr.vmem [resolvable:$true] %s22
      %28 = dma.hbm_to_vmem [thread:$0]  %s1, 2048, %s23, [#allocation5], 128, 128, 8
    $region9: #{tpu_custom_call.1} parent=1 // pred_fallthru
      _
    // Predicated region
    $region10: #{tpu_custom_call.1} parent=1 // pred_check
      _
    $region11: #{tpu_custom_call.1} parent=1 // pred_check_branch
      %30 = sbr.rel (0) target = $region13
    $region12: #{tpu_custom_call.1} parent=1 // pred_region
      %s32 = ssub.s32 2048, 2048
      %33 = vsyncadd [#allocation8], %s32
      %s34 = sshll.u32 [#allocation7], 4
      %s35 = int_to_ptr.vmem [resolvable:$true] %s34
      %40 = dma.hbm_to_vmem [thread:$0]  %s2, 2048, %s35, [#allocation8], 128, 128, 8
    $region13: #{tpu_custom_call.1} parent=1 // pred_fallthru
      _
    // Predicated region
    $region14: #{tpu_custom_call.1} parent=1 // pred_check
      _
    $region15: #{tpu_custom_call.1} parent=1 // pred_check_branch
      %42 = sbr.rel (0) target = $region17
    $region16: #{tpu_custom_call.1} parent=1 // pred_region
      %s44 = ssub.s32 128, 128
      %45 = vsyncadd [#allocation8], %s44
      %s47 = sshll.u32 [#allocation9], 4
      %s48 = int_to_ptr.vmem [resolvable:$true] %s47
      %50 = dma.hbm_to_vmem [thread:$0]  %s3, 128, %s48, [#allocation8]
    $region17: #{tpu_custom_call.1} parent=1 // pred_fallthru
      _
    // Predicated region
    $region18: #{tpu_custom_call.1} parent=1 // pred_check
      _
    $region19: #{tpu_custom_call.1} parent=1 // pred_check_branch
      %52 = sbr.rel (0) target = $region21
    $region20: #{tpu_custom_call.1} parent=1 // pred_region
      %s54 = ssub.s32 128, 128
      %55 = vsyncadd [#allocation11], %s54
      %s57 = sshll.u32 [#allocation10], 4
      %s58 = int_to_ptr.vmem [resolvable:$true] %s57
      %60 = dma.hbm_to_vmem [thread:$0]  %s4, 128, %s58, [#allocation11]
    $region21: #{tpu_custom_call.1} parent=1 // pred_fallthru
      _
    // Predicated region
    $region22: #{tpu_custom_call.1} parent=1 // pred_check
      _
    $region23: #{tpu_custom_call.1} parent=1 // pred_check_branch
      %62 = sbr.rel (0) target = $region25
    $region24: #{tpu_custom_call.1} parent=1 // pred_region
      %63 = dma.done [#allocation5], 2048
    $region25: #{tpu_custom_call.1} parent=1 // pred_fallthru
      _
    // Predicated region
    $region26: #{tpu_custom_call.1} parent=1 // pred_check
      _
    $region27: #{tpu_custom_call.1} parent=1 // pred_check_branch
      %65 = sbr.rel (0) target = $region29
    $region28: #{tpu_custom_call.1} parent=1 // pred_region
      %66 = dma.done [#allocation8], 2048
    $region29: #{tpu_custom_call.1} parent=1 // pred_fallthru
      _
    // Predicated region
    $region30: #{tpu_custom_call.1} parent=1 // pred_check
      _
    $region31: #{tpu_custom_call.1} parent=1 // pred_check_branch
      %68 = sbr.rel (0) target = $region33
    $region32: #{tpu_custom_call.1} parent=1 // pred_region
      %69 = dma.done [#allocation8], 128
    $region33: #{tpu_custom_call.1} parent=1 // pred_fallthru
      _
    // Predicated region
    $region34: #{tpu_custom_call.1} parent=1 // pred_check
      _
    $region35: #{tpu_custom_call.1} parent=1 // pred_check_branch
      %71 = sbr.rel (0) target = $region37
    $region36: #{tpu_custom_call.1} parent=1 // pred_region
      %72 = dma.done [#allocation11], 128
    $region37: #{tpu_custom_call.1} parent=1 // pred_fallthru
      _
    %p73 = scmp.eq.s32.totalorder 0, 0
    // Predicated region
    $region38: #{tpu_custom_call.1} parent=1 // pred_check
      %p74 = pneg %p73
    $region39: #{tpu_custom_call.1} parent=1 // pred_check_branch
      %76 = sbr.rel (%p74) target = $region41
    $region40: #{tpu_custom_call.1} parent=1 // pred_region
      %vm77 = vcmask 7168
      %78 = vst.msk [vmem:[#allocation2] sm:$0xff] %vm77, 0.0
    $region41: #{tpu_custom_call.1} parent=1 // pred_fallthru
      _
    %v79 = vld [vmem:[#allocation4] sm:$0xff]
    %v80 = vld [vmem:[#allocation4 + $0x8] sm:$0xff]
    %v81 = vld [vmem:[#allocation4 + $0x10] sm:$0xff]
    %v82 = vld [vmem:[#allocation4 + $0x18] sm:$0xff]
    %v83 = vld [vmem:[#allocation4 + $0x20] sm:$0xff]
    %v84 = vld [vmem:[#allocation4 + $0x28] sm:$0xff]
    %v85 = vld [vmem:[#allocation4 + $0x30] sm:$0xff]
    %v86 = vld [vmem:[#allocation4 + $0x38] sm:$0xff]
    %v87 = vld [vmem:[#allocation4 + $0x40] sm:$0xff]
    %v88 = vld [vmem:[#allocation4 + $0x48] sm:$0xff]
    %v89 = vld [vmem:[#allocation4 + $0x50] sm:$0xff]
    %v90 = vld [vmem:[#allocation4 + $0x58] sm:$0xff]
    %v91 = vld [vmem:[#allocation4 + $0x60] sm:$0xff]
    %v92 = vld [vmem:[#allocation4 + $0x68] sm:$0xff]
    %v93 = vld [vmem:[#allocation4 + $0x70] sm:$0xff]
    %v94 = vld [vmem:[#allocation4 + $0x78] sm:$0xff]
    %v95 = vld [vmem:[#allocation7] sm:$0xff]
    %v96 = vld [vmem:[#allocation7 + $0x8] sm:$0xff]
    %v97 = vld [vmem:[#allocation7 + $0x10] sm:$0xff]
    %v98 = vld [vmem:[#allocation7 + $0x18] sm:$0xff]
    %v99 = vld [vmem:[#allocation7 + $0x20] sm:$0xff]
    %v100 = vld [vmem:[#allocation7 + $0x28] sm:$0xff]
    %v101 = vld [vmem:[#allocation7 + $0x30] sm:$0xff]
    %v102 = vld [vmem:[#allocation7 + $0x38] sm:$0xff]
    %v103 = vld [vmem:[#allocation7 + $0x40] sm:$0xff]
    %v104 = vld [vmem:[#allocation7 + $0x48] sm:$0xff]
    %v105 = vld [vmem:[#allocation7 + $0x50] sm:$0xff]
    %v106 = vld [vmem:[#allocation7 + $0x58] sm:$0xff]
    %v107 = vld [vmem:[#allocation7 + $0x60] sm:$0xff]
    %v108 = vld [vmem:[#allocation7 + $0x68] sm:$0xff]
    %v109 = vld [vmem:[#allocation7 + $0x70] sm:$0xff]
    %v110 = vld [vmem:[#allocation7 + $0x78] sm:$0xff]
    %v111 = vmul.f32 %v79, %v95
    %v112 = vmul.f32 %v80, %v96
    %v113 = vmul.f32 %v81, %v97
    %v114 = vmul.f32 %v82, %v98
    %v115 = vmul.f32 %v83, %v99
    %v116 = vmul.f32 %v84, %v100
    %v117 = vmul.f32 %v85, %v101
    %v118 = vmul.f32 %v86, %v102
    %v119 = vmul.f32 %v87, %v103
    %v120 = vmul.f32 %v88, %v104
    %v121 = vmul.f32 %v89, %v105
    %v122 = vmul.f32 %v90, %v106
    %v123 = vmul.f32 %v91, %v107
    %v124 = vmul.f32 %v92, %v108
    %v125 = vmul.f32 %v93, %v109
    %v126 = vmul.f32 %v94, %v110
    %127 = vadd.xlane.f32.xlu0 %v111
    %v128 = vpop.xlane.xlu0 %127
    %129 = vadd.xlane.f32.xlu0 %v112
    %v130 = vpop.xlane.xlu0 %129
    %131 = vadd.xlane.f32.xlu0 %v113
    %v132 = vpop.xlane.xlu0 %131
    %133 = vadd.xlane.f32.xlu0 %v114
    %v134 = vpop.xlane.xlu0 %133
    %135 = vadd.xlane.f32.xlu0 %v115
    %v136 = vpop.xlane.xlu0 %135
    %137 = vadd.xlane.f32.xlu0 %v116
    %v138 = vpop.xlane.xlu0 %137
    %139 = vadd.xlane.f32.xlu0 %v117
    %v140 = vpop.xlane.xlu0 %139
    %141 = vadd.xlane.f32.xlu0 %v118
    %v142 = vpop.xlane.xlu0 %141
    %143 = vadd.xlane.f32.xlu0 %v119
    %v144 = vpop.xlane.xlu0 %143
    %145 = vadd.xlane.f32.xlu0 %v120
    %v146 = vpop.xlane.xlu0 %145
    %147 = vadd.xlane.f32.xlu0 %v121
    %v148 = vpop.xlane.xlu0 %147
    %149 = vadd.xlane.f32.xlu0 %v122
    %v150 = vpop.xlane.xlu0 %149
    %151 = vadd.xlane.f32.xlu0 %v123
    %v152 = vpop.xlane.xlu0 %151
    %153 = vadd.xlane.f32.xlu0 %v124
    %v154 = vpop.xlane.xlu0 %153
    %155 = vadd.xlane.f32.xlu0 %v125
    %v156 = vpop.xlane.xlu0 %155
    %157 = vadd.xlane.f32.xlu0 %v126
    %v158 = vpop.xlane.xlu0 %157
    %v159 = vmul.f32 %v79, %v79
    %v160 = vmul.f32 %v80, %v80
    %v161 = vmul.f32 %v81, %v81
    %v162 = vmul.f32 %v82, %v82
    %v163 = vmul.f32 %v83, %v83
    %v164 = vmul.f32 %v84, %v84
    %v165 = vmul.f32 %v85, %v85
    %v166 = vmul.f32 %v86, %v86
    %v167 = vmul.f32 %v87, %v87
    %v168 = vmul.f32 %v88, %v88
    %v169 = vmul.f32 %v89, %v89
    %v170 = vmul.f32 %v90, %v90
    %v171 = vmul.f32 %v91, %v91
    %v172 = vmul.f32 %v92, %v92
    %v173 = vmul.f32 %v93, %v93
    %v174 = vmul.f32 %v94, %v94
    %175 = vadd.xlane.f32.xlu0 %v159
    %v176 = vpop.xlane.xlu0 %175
    %177 = vadd.xlane.f32.xlu0 %v160
    %v178 = vpop.xlane.xlu0 %177
    %179 = vadd.xlane.f32.xlu0 %v161
    %v180 = vpop.xlane.xlu0 %179
    %181 = vadd.xlane.f32.xlu0 %v162
    %v182 = vpop.xlane.xlu0 %181
    %183 = vadd.xlane.f32.xlu0 %v163
    %v184 = vpop.xlane.xlu0 %183
    %185 = vadd.xlane.f32.xlu0 %v164
    %v186 = vpop.xlane.xlu0 %185
    %187 = vadd.xlane.f32.xlu0 %v165
    %v188 = vpop.xlane.xlu0 %187
    %189 = vadd.xlane.f32.xlu0 %v166
    %v190 = vpop.xlane.xlu0 %189
    %191 = vadd.xlane.f32.xlu0 %v167
    %v192 = vpop.xlane.xlu0 %191
    %193 = vadd.xlane.f32.xlu0 %v168
    %v194 = vpop.xlane.xlu0 %193
    %195 = vadd.xlane.f32.xlu0 %v169
    %v196 = vpop.xlane.xlu0 %195
    %197 = vadd.xlane.f32.xlu0 %v170
    %v198 = vpop.xlane.xlu0 %197
    %199 = vadd.xlane.f32.xlu0 %v171
    %v200 = vpop.xlane.xlu0 %199
    %201 = vadd.xlane.f32.xlu0 %v172
    %v202 = vpop.xlane.xlu0 %201
    %203 = vadd.xlane.f32.xlu0 %v173
    %v204 = vpop.xlane.xlu0 %203
    %205 = vadd.xlane.f32.xlu0 %v174
    %v206 = vpop.xlane.xlu0 %205
    %v207 = vmul.f32 %v95, %v95
    %v208 = vmul.f32 %v96, %v96
    %v209 = vmul.f32 %v97, %v97
    %v210 = vmul.f32 %v98, %v98
    %v211 = vmul.f32 %v99, %v99
    %v212 = vmul.f32 %v100, %v100
    %v213 = vmul.f32 %v101, %v101
    %v214 = vmul.f32 %v102, %v102
    %v215 = vmul.f32 %v103, %v103
    %v216 = vmul.f32 %v104, %v104
    %v217 = vmul.f32 %v105, %v105
    %v218 = vmul.f32 %v106, %v106
    %v219 = vmul.f32 %v107, %v107
    %v220 = vmul.f32 %v108, %v108
    %v221 = vmul.f32 %v109, %v109
    %v222 = vmul.f32 %v110, %v110
    %223 = vadd.xlane.f32.xlu0 %v207
    %v224 = vpop.xlane.xlu0 %223
    %225 = vadd.xlane.f32.xlu0 %v208
    %v226 = vpop.xlane.xlu0 %225
    %227 = vadd.xlane.f32.xlu0 %v209
    %v228 = vpop.xlane.xlu0 %227
    %229 = vadd.xlane.f32.xlu0 %v210
    %v230 = vpop.xlane.xlu0 %229
    %231 = vadd.xlane.f32.xlu0 %v211
    %v232 = vpop.xlane.xlu0 %231
    %233 = vadd.xlane.f32.xlu0 %v212
    %v234 = vpop.xlane.xlu0 %233
    %235 = vadd.xlane.f32.xlu0 %v213
    %v236 = vpop.xlane.xlu0 %235
    %237 = vadd.xlane.f32.xlu0 %v214
    %v238 = vpop.xlane.xlu0 %237
    %239 = vadd.xlane.f32.xlu0 %v215
    %v240 = vpop.xlane.xlu0 %239
    %241 = vadd.xlane.f32.xlu0 %v216
    %v242 = vpop.xlane.xlu0 %241
    %243 = vadd.xlane.f32.xlu0 %v217
    %v244 = vpop.xlane.xlu0 %243
    %245 = vadd.xlane.f32.xlu0 %v218
    %v246 = vpop.xlane.xlu0 %245
    %247 = vadd.xlane.f32.xlu0 %v219
    %v248 = vpop.xlane.xlu0 %247
    %249 = vadd.xlane.f32.xlu0 %v220
    %v250 = vpop.xlane.xlu0 %249
    %251 = vadd.xlane.f32.xlu0 %v221
    %v252 = vpop.xlane.xlu0 %251
    %253 = vadd.xlane.f32.xlu0 %v222
    %v254 = vpop.xlane.xlu0 %253
    %v255 = vmax.f32 %v176, 1e-16
    %v256 = vmax.f32 %v178, 1e-16
    %v257 = vmax.f32 %v180, 1e-16
    %v258 = vmax.f32 %v182, 1e-16
    %v259 = vmax.f32 %v184, 1e-16
    %v260 = vmax.f32 %v186, 1e-16
    %v261 = vmax.f32 %v188, 1e-16
    %v262 = vmax.f32 %v190, 1e-16
    %v263 = vmax.f32 %v192, 1e-16
    %v264 = vmax.f32 %v194, 1e-16
    %v265 = vmax.f32 %v196, 1e-16
    %v266 = vmax.f32 %v198, 1e-16
    %v267 = vmax.f32 %v200, 1e-16
    %v268 = vmax.f32 %v202, 1e-16
    %v269 = vmax.f32 %v204, 1e-16
    %v270 = vmax.f32 %v206, 1e-16
    %v271 = vrsqrt.pop %v255
    %v272 = vrsqrt.pop %v256
    %v273 = vrsqrt.pop %v257
    %v274 = vrsqrt.pop %v258
    %v275 = vrsqrt.pop %v259
    %v276 = vrsqrt.pop %v260
    %v277 = vrsqrt.pop %v261
    %v278 = vrsqrt.pop %v262
    %v279 = vrsqrt.pop %v263
    %v280 = vrsqrt.pop %v264
    %v281 = vrsqrt.pop %v265
    %v282 = vrsqrt.pop %v266
    %v283 = vrsqrt.pop %v267
    %v284 = vrsqrt.pop %v268
    %v285 = vrsqrt.pop %v269
    %v286 = vrsqrt.pop %v270
    %v287 = vmul.f32 %v128, %v271
    %v288 = vmul.f32 %v130, %v272
    %v289 = vmul.f32 %v132, %v273
    %v290 = vmul.f32 %v134, %v274
    %v291 = vmul.f32 %v136, %v275
    %v292 = vmul.f32 %v138, %v276
    %v293 = vmul.f32 %v140, %v277
    %v294 = vmul.f32 %v142, %v278
    %v295 = vmul.f32 %v144, %v279
    %v296 = vmul.f32 %v146, %v280
    %v297 = vmul.f32 %v148, %v281
    %v298 = vmul.f32 %v150, %v282
    %v299 = vmul.f32 %v152, %v283
    %v300 = vmul.f32 %v154, %v284
    %v301 = vmul.f32 %v156, %v285
    %v302 = vmul.f32 %v158, %v286
    %v303 = vmax.f32 %v224, 1e-16
    %v304 = vmax.f32 %v226, 1e-16
    %v305 = vmax.f32 %v228, 1e-16
    %v306 = vmax.f32 %v230, 1e-16
    %v307 = vmax.f32 %v232, 1e-16
    %v308 = vmax.f32 %v234, 1e-16
    %v309 = vmax.f32 %v236, 1e-16
    %v310 = vmax.f32 %v238, 1e-16
    %v311 = vmax.f32 %v240, 1e-16
    %v312 = vmax.f32 %v242, 1e-16
    %v313 = vmax.f32 %v244, 1e-16
    %v314 = vmax.f32 %v246, 1e-16
    %v315 = vmax.f32 %v248, 1e-16
    %v316 = vmax.f32 %v250, 1e-16
    %v317 = vmax.f32 %v252, 1e-16
    %v318 = vmax.f32 %v254, 1e-16
    %v319 = vrsqrt.pop %v303
    %v320 = vrsqrt.pop %v304
    %v321 = vrsqrt.pop %v305
    %v322 = vrsqrt.pop %v306
    %v323 = vrsqrt.pop %v307
    %v324 = vrsqrt.pop %v308
    %v325 = vrsqrt.pop %v309
    %v326 = vrsqrt.pop %v310
    %v327 = vrsqrt.pop %v311
    %v328 = vrsqrt.pop %v312
    %v329 = vrsqrt.pop %v313
    %v330 = vrsqrt.pop %v314
    %v331 = vrsqrt.pop %v315
    %v332 = vrsqrt.pop %v316
    %v333 = vrsqrt.pop %v317
    %v334 = vrsqrt.pop %v318
    %v335 = vmul.f32 %v287, %v319
    %v336 = vmul.f32 %v288, %v320
    %v337 = vmul.f32 %v289, %v321
    %v338 = vmul.f32 %v290, %v322
    %v339 = vmul.f32 %v291, %v323
    %v340 = vmul.f32 %v292, %v324
    %v341 = vmul.f32 %v293, %v325
    %v342 = vmul.f32 %v294, %v326
    %v343 = vmul.f32 %v295, %v327
    %v344 = vmul.f32 %v296, %v328
    %v345 = vmul.f32 %v297, %v329
    %v346 = vmul.f32 %v298, %v330
    %v347 = vmul.f32 %v299, %v331
    %v348 = vmul.f32 %v300, %v332
    %v349 = vmul.f32 %v301, %v333
    %v350 = vmul.f32 %v302, %v334
    %v351 = vld [vmem:[#allocation2] sm:$0xff]
    %v368 = vlaneseq
    %v369 = vand.u32 %v368, 127
    %v370 = vlaneseq
    %v371 = vshrl.u32 %v370, 7
    %v372 = vsub.s32 %v369, %v371
    %v373 = vrot.slane %v335, %v372
    %v374 = vadd.s32 %v369, 4294967288
    %v375 = vlaneseq
    %v376 = vshrl.u32 %v375, 7
    %v377 = vsub.s32 %v374, %v376
    %v378 = vrot.slane %v336, %v377
    %vm379 = vcmask 130112
    %v380 = vsel %vm379, %v378, %v373
    %v381 = vlaneseq
    %v382 = vshrl.u32 %v381, 7
    %v383 = vsub.s32 %v369, %v382
    %v384 = vrot.slane %v337, %v383
    %v385 = vlaneseq
    %v386 = vshrl.u32 %v385, 7
    %v387 = vsub.s32 %v374, %v386
    %v388 = vrot.slane %v338, %v387
    %v389 = vsel %vm379, %v388, %v384
    %v390 = vlaneseq
    %v391 = vshrl.u32 %v390, 7
    %v392 = vsub.s32 %v369, %v391
    %v393 = vrot.slane %v339, %v392
    %v394 = vlaneseq
    %v395 = vshrl.u32 %v394, 7
    %v396 = vsub.s32 %v374, %v395
    %v397 = vrot.slane %v340, %v396
    %v398 = vsel %vm379, %v397, %v393
    %v399 = vlaneseq
    %v400 = vshrl.u32 %v399, 7
    %v401 = vsub.s32 %v369, %v400
    %v402 = vrot.slane %v341, %v401
    %v403 = vlaneseq
    %v404 = vshrl.u32 %v403, 7
    %v405 = vsub.s32 %v374, %v404
    %v406 = vrot.slane %v342, %v405
    %v407 = vsel %vm379, %v406, %v402
    %v408 = vlaneseq
    %v409 = vshrl.u32 %v408, 7
    %v410 = vsub.s32 %v369, %v409
    %v411 = vrot.slane %v343, %v410
    %v412 = vlaneseq
    %v413 = vshrl.u32 %v412, 7
    %v414 = vsub.s32 %v374, %v413
    %v415 = vrot.slane %v344, %v414
    %v416 = vsel %vm379, %v415, %v411
    %v417 = vlaneseq
    %v418 = vshrl.u32 %v417, 7
    %v419 = vsub.s32 %v369, %v418
    %v420 = vrot.slane %v345, %v419
    %v421 = vlaneseq
    %v422 = vshrl.u32 %v421, 7
    %v423 = vsub.s32 %v374, %v422
    %v424 = vrot.slane %v346, %v423
    %v425 = vsel %vm379, %v424, %v420
    %v426 = vlaneseq
    %v427 = vshrl.u32 %v426, 7
    %v428 = vsub.s32 %v369, %v427
    %v429 = vrot.slane %v347, %v428
    %v430 = vlaneseq
    %v431 = vshrl.u32 %v430, 7
    %v432 = vsub.s32 %v374, %v431
    %v433 = vrot.slane %v348, %v432
    %v434 = vsel %vm379, %v433, %v429
    %v435 = vlaneseq
    %v436 = vshrl.u32 %v435, 7
    %v437 = vsub.s32 %v369, %v436
    %v438 = vrot.slane %v349, %v437
    %v439 = vlaneseq
    %v440 = vshrl.u32 %v439, 7
    %v441 = vsub.s32 %v374, %v440
    %v442 = vrot.slane %v350, %v441
    %v443 = vsel %vm379, %v442, %v438
    %vm444 = vcmask 1041409
    %v445 = vsel %vm444, %v389, %v380
    %vm446 = vcmask 1042434
    %v447 = vsel %vm446, %v398, %v445
    %vm448 = vcmask 1043459
    %v449 = vsel %vm448, %v407, %v447
    %vm450 = vcmask 1044484
    %v451 = vsel %vm450, %v416, %v449
    %vm452 = vcmask 1045509
    %v453 = vsel %vm452, %v425, %v451
    %vm454 = vcmask 1046534
    %v455 = vsel %vm454, %v434, %v453
    %vm456 = vcmask 1047559
    %v457 = vsel %vm456, %v443, %v455
    %vm459 = vcmask 130048
    %v460 = vsel %vm459, %v457, 0.0
    %461 = vadd.xlane.f32.xlu0 %v460
    %v462 = vpop.xlane.xlu0 %461
    %v463 = vadd.f32 %v351, %v462
    %vm464 = vcmask 7168
    %465 = vst.msk [vmem:[#allocation2] sm:$0xff] %vm464, %v463
    // Predicated region
    $region42: #{tpu_custom_call.1} parent=1 // pred_check
      %p466 = pneg %p73
    $region43: #{tpu_custom_call.1} parent=1 // pred_check_branch
      %468 = sbr.rel (%p466) target = $region45
    $region44: #{tpu_custom_call.1} parent=1 // pred_region
      %v469 = vld [vmem:[#allocation9] sm:$0xff]
      %v470 = vld [vmem:[#allocation10] sm:$0xff]
      %v471 = vmul.f32 %v469, %v470
      %472 = vadd.xlane.f32.xlu0 %v471
      %v473 = vpop.xlane.xlu0 %472
      %v474 = vmul.f32 %v469, %v469
      %475 = vadd.xlane.f32.xlu0 %v474
      %v476 = vpop.xlane.xlu0 %475
      %v477 = vmax.f32 %v476, 1e-16
      %v478 = vmul.f32 %v470, %v470
      %479 = vadd.xlane.f32.xlu0 %v478
      %v480 = vpop.xlane.xlu0 %479
      %v481 = vmax.f32 %v480, 1e-16
      %v482 = vrsqrt.pop %v477
      %v483 = vmul.f32 %v473, %v482
      %v484 = vrsqrt.pop %v481
      %v485 = vmul.f32 %v483, %v484
      %v486 = vsub.f32 1.0, %v485
      %v487 = vld [vmem:[#allocation2] sm:$0xff]
      %v488 = vmul.f32 %v487, 0.0625
      %v489 = vsub.f32 1.0, %v488
      %s490 = sld [smem:[#allocation3]]
      %v491 = vstv %s490
      %v492 = vmul.f32 %v491, %v489
      %s493 = ssub.f32 1.0, %s490
      %v494 = vstv %s493
      %v495 = vmul.f32 %v494, %v486
      %v496 = vadd.f32 %v492, %v495
      %498 = vset.pattern.permute.xlu0 0
      %499 = vperm.xlu0 %498, %v496
      %v500 = vpop.permute.xlu0 %499
      %502 = vst [vmem:[#allocation12] sm:$0xff] %v500
    $region45: #{tpu_custom_call.1} parent=1 // pred_fallthru
      _
    // Predicated region
    $region46: #{tpu_custom_call.1} parent=1 // pred_check
      _
    $region47: #{tpu_custom_call.1} parent=1 // pred_check_branch
      %504 = sbr.rel (0) target = $region49
    $region48: #{tpu_custom_call.1} parent=1 // pred_region
      %s506 = ssub.s32 128, 128
      %507 = vsyncadd [#allocation6], %s506
      %s509 = sshll.u32 [#allocation12], 4
      %s510 = int_to_ptr.vmem [resolvable:$true] %s509
      %512 = dma.vmem_to_hbm [thread:$0]  %s510, 128, %s5, [#allocation6]
    $region49: #{tpu_custom_call.1} parent=1 // pred_fallthru
      _
    // Predicated region
    $region50: #{tpu_custom_call.1} parent=1 // pred_check
      _
    $region51: #{tpu_custom_call.1} parent=1 // pred_check_branch
      %514 = sbr.rel (0) target = $region53
    $region52: #{tpu_custom_call.1} parent=1 // pred_region
      %515 = dma.done [#allocation6], 128
    $region53: #{tpu_custom_call.1} parent=1 // pred_fallthru
      _
    %516 = vsyncpa [#allocation5], 1
    %517 = vsyncpa [#allocation8], 1
    %518 = vsyncpa [#allocation11], 1
    %519 = vsyncpa [#allocation6], 1

</llo_original>
